<compile_context>
chip_gen: v7x
topology: tpu7x:2x2x1
jax: 0.10.0
libtpu: 0.0.40
codegen_flags: <defaults>
</compile_context>

<pallas_src>
import jax
import jax.numpy as jnp
from jax import lax
from jax.experimental import pallas as pl
from jax.experimental.pallas import tpu as pltpu

BN_EPS = 1e-5
LEAKY_SLOPE = 0.2


def projection_kernel(embed_ref, w_ref, gb_ref, out_ref):
    # embed_ref: (B, E) bf16
    # w_ref:     (P, E) bf16  (PyTorch Linear weight layout, no transpose needed)
    # gb_ref:    (2, P) f32   row 0 = gamma, row 1 = beta
    # out_ref:   (B, P) f32
    #
    # Linear (bias omitted — it cancels exactly under training-mode BN):
    # contract E of embed against E of weight -> (B, P), MXU, f32 accumulate.
    proj = lax.dot_general(
        embed_ref[...], w_ref[...],
        dimension_numbers=(((1,), (1,)), ((), ())),
        preferred_element_type=jnp.float32)

    # BatchNorm1d (training mode: batch mean, biased variance), one-pass stats.
    inv_b = 1.0 / proj.shape[0]
    mean = jnp.sum(proj, axis=0, keepdims=True) * inv_b
    mean_sq = jnp.sum(proj * proj, axis=0, keepdims=True) * inv_b
    var = jnp.maximum(mean_sq - mean * mean, 0.0)      # clamp: cancellation guard

    gamma = gb_ref[0:1, :]
    beta = gb_ref[1:2, :]
    scale = gamma * lax.rsqrt(var + BN_EPS)            # rsqrt -> EUP slot
    shift = beta - mean * scale
    y = proj * scale + shift

    # LeakyReLU(0.2): max(y, 0.2*y) (valid for slope in (0,1)).
    out_ref[...] = jnp.maximum(y, LEAKY_SLOPE * y)


def concat_embed(inp, embed, weight, bias, gamma, beta):
    """inp: (B, C, H, W) with H=W=4; embed: (B, E); weight: (P, E) (PyTorch layout)."""
    B, C, H, W = inp.shape
    P, E = weight.shape
    del bias  # exact no-op under training-mode BatchNorm1d (absorbed by the batch mean)

    gb = jnp.stack([gamma, beta], axis=0).astype(jnp.float32)  # (2, P): one DMA

    vmem = pl.BlockSpec(memory_space=pltpu.MemorySpace.VMEM)
    y = pl.pallas_call(
        projection_kernel,
        out_shape=jax.ShapeDtypeStruct((B, P), jnp.float32),
        in_specs=[vmem, vmem, vmem],
        out_specs=vmem,
    )(embed.astype(jnp.bfloat16), weight.astype(jnp.bfloat16), gb)

    # repeat(4,4,1,1).permute(2,3,0,1) == broadcast (B,P) -> (B,P,4,4);
    # XLA fuses this broadcast into the concat copy (no kernel traffic).
    rep = jnp.broadcast_to(y[:, :, None, None], (B, P, H, W)).astype(inp.dtype)
    return jnp.concatenate([inp, rep], axis=1)


def concat_embed_reference(inp, embed, weight, bias, gamma, beta,
                           matmul_dtype=jnp.float32):
    """Pure-JAX reference mirroring the PyTorch forward (BN in training mode).

    matmul_dtype lets us also build a reference with the same bf16-quantized
    MXU operands the kernel uses, for a tight numerical comparison.
    """
    proj = jnp.dot(embed.astype(matmul_dtype), weight.astype(matmul_dtype).T,
                   preferred_element_type=jnp.float32) + bias
    mean = jnp.mean(proj, axis=0, keepdims=True)
    var = jnp.mean(jnp.square(proj - mean), axis=0, keepdims=True)
    y = (proj - mean) / jnp.sqrt(var + BN_EPS)
    y = y * gamma + beta
    y = jnp.where(y >= 0, y, LEAKY_SLOPE * y)
    B, P = y.shape
    rep = jnp.broadcast_to(y[:, :, None, None], (B, P, 4, 4)).astype(inp.dtype)
    return jnp.concatenate([inp, rep], axis=1)


if __name__ == "__main__":
    # Shapes implied by the module: spatial must be 4x4 for the concat to work.
    B, C, H, W = 4, 4, 4, 4
    embed_dim, projected_embed_dim = 32, 16

    key = jax.random.PRNGKey(0)
    k_inp, k_emb, k_w, k_b, k_g, k_bt = jax.random.split(key, 6)

    inp = jax.random.normal(k_inp, (B, C, H, W), dtype=jnp.float32)
    embed = jax.random.normal(k_emb, (B, embed_dim), dtype=jnp.float32)

    # Deterministic parameter init (Linear weight/bias, BN gamma/beta).
    weight = jax.random.normal(k_w, (projected_embed_dim, embed_dim),
                               dtype=jnp.float32) * 0.1
    bias = jax.random.normal(k_b, (projected_embed_dim,), dtype=jnp.float32) * 0.1
    gamma = 1.0 + 0.1 * jax.random.normal(k_g, (projected_embed_dim,),
                                          dtype=jnp.float32)
    beta = 0.1 * jax.random.normal(k_bt, (projected_embed_dim,),
                                   dtype=jnp.float32)

    out = concat_embed(inp, embed, weight, bias, gamma, beta)
    out = jax.block_until_ready(out)
    assert out.shape == (B, C + projected_embed_dim, H, W)

    # Tight check against a reference using the same bf16-quantized MXU operands
    # (isolates accumulation-order / bias-cancellation rounding only).
    ref_bf16 = concat_embed_reference(inp, embed, weight, bias, gamma, beta,
                                      matmul_dtype=jnp.bfloat16)
    assert jnp.allclose(out, ref_bf16, rtol=1e-3, atol=1e-3)

    # Loose sanity check against the exact f32 PyTorch-mirror reference
    # (difference is only the bf16 operand quantization feeding the MXU).
    ref_f32 = concat_embed_reference(inp, embed, weight, bias, gamma, beta)
    assert jnp.allclose(out, ref_f32, rtol=1e-1, atol=1e-1)

    print("KERNEL_OK")
</pallas_src>

<mosaic_0001>
module attributes {stable_mosaic.version = 11 : i64} {
  func.func @projection_kernel(%arg0: memref<4x32xbf16, #tpu.memory_space<vmem>>, %arg1: memref<16x32xbf16, #tpu.memory_space<vmem>>, %arg2: memref<2x16xf32, #tpu.memory_space<vmem>>, %arg3: memref<4x16xf32, #tpu.memory_space<vmem>>) attributes {dimension_semantics = [], scalar_prefetch = 0 : i64, scratch_operands = 0 : i64, tpu.core_type = #tpu.core_type<tc>} {
    %c0 = arith.constant 0 : index
    %c0_0 = arith.constant 0 : index
    %0 = vector.load %arg0[%c0, %c0_0] : memref<4x32xbf16, #tpu.memory_space<vmem>>, vector<4x32xbf16>
    %c0_1 = arith.constant 0 : index
    %c0_2 = arith.constant 0 : index
    %1 = vector.load %arg1[%c0_1, %c0_2] : memref<16x32xbf16, #tpu.memory_space<vmem>>, vector<16x32xbf16>
    %cst = arith.constant dense<0.000000e+00> : vector<4x16xf32>
    %2 = tpu.matmul %0, %1, %cst {dimension_numbers = #tpu.dot_dimension_numbers<[1], [1], [0], [0], [0, 0, 1, 0], [], []>} : vector<4x32xbf16>, vector<16x32xbf16>, vector<4x16xf32> -> vector<4x16xf32>
    %cst_3 = arith.constant dense<0.000000e+00> : vector<16xf32>
    %3 = vector.multi_reduction <add>, %2, %cst_3 [0] : vector<4x16xf32> to vector<16xf32>
    %4 = vector.shape_cast %3 : vector<16xf32> to vector<1x16xf32>
    %cst_4 = arith.constant 2.500000e-01 : f32
    %5 = vector.broadcast %cst_4 : f32 to vector<1x16xf32>
    %6 = arith.mulf %4, %5 : vector<1x16xf32>
    %7 = arith.mulf %2, %2 : vector<4x16xf32>
    %cst_5 = arith.constant dense<0.000000e+00> : vector<16xf32>
    %8 = vector.multi_reduction <add>, %7, %cst_5 [0] : vector<4x16xf32> to vector<16xf32>
    %9 = vector.shape_cast %8 : vector<16xf32> to vector<1x16xf32>
    %cst_6 = arith.constant 2.500000e-01 : f32
    %10 = vector.broadcast %cst_6 : f32 to vector<1x16xf32>
    %11 = arith.mulf %9, %10 : vector<1x16xf32>
    %12 = arith.mulf %6, %6 : vector<1x16xf32>
    %13 = arith.subf %11, %12 : vector<1x16xf32>
    %cst_7 = arith.constant 0.000000e+00 : f32
    %14 = vector.broadcast %cst_7 : f32 to vector<1x16xf32>
    %15 = arith.maximumf %13, %14 : vector<1x16xf32>
    %c0_8 = arith.constant 0 : index
    %c0_9 = arith.constant 0 : index
    %16 = vector.load %arg2[%c0_8, %c0_9] : memref<2x16xf32, #tpu.memory_space<vmem>>, vector<1x16xf32>
    %c1 = arith.constant 1 : index
    %c0_10 = arith.constant 0 : index
    %17 = vector.load %arg2[%c1, %c0_10] : memref<2x16xf32, #tpu.memory_space<vmem>>, vector<1x16xf32>
    %cst_11 = arith.constant 9.99999974E-6 : f32
    %18 = vector.broadcast %cst_11 : f32 to vector<1x16xf32>
    %19 = arith.addf %15, %18 : vector<1x16xf32>
    %20 = math.rsqrt %19 : vector<1x16xf32>
    %21 = arith.mulf %16, %20 : vector<1x16xf32>
    %22 = arith.mulf %6, %21 : vector<1x16xf32>
    %23 = arith.subf %17, %22 : vector<1x16xf32>
    %24 = vector.broadcast %21 : vector<1x16xf32> to vector<4x16xf32>
    %25 = arith.mulf %2, %24 : vector<4x16xf32>
    %26 = vector.broadcast %23 : vector<1x16xf32> to vector<4x16xf32>
    %27 = arith.addf %25, %26 : vector<4x16xf32>
    %cst_12 = arith.constant 2.000000e-01 : f32
    %28 = vector.broadcast %cst_12 : f32 to vector<4x16xf32>
    %29 = arith.mulf %28, %27 : vector<4x16xf32>
    %30 = arith.maximumf %27, %29 : vector<4x16xf32>
    %c0_13 = arith.constant 0 : index
    %c0_14 = arith.constant 0 : index
    %31 = vector.load %arg3[%c0_13, %c0_14] : memref<4x16xf32, #tpu.memory_space<vmem>>, vector<4x16xf32>
    tpu.vector_store %arg3[%c0_13, %c0_14], %30 {strides = array<i32>} : memref<4x16xf32, #tpu.memory_space<vmem>>, vector<4x16xf32>,
    return
  }
}

</mosaic_0001>

<llo_original>
// kernel: tpu_custom_call.1
$region0: #{tpu_custom_call.1}
  #allocation0 [shape = 'u32[]', space=smem, size = 0x4, offset = 0x4, fixed_abs, tag = 'smem constant byte address 0x4 - core index']
  #allocation1 [shape = 'u32[144,128]{1,0:T(1,128)}', space=vmem, size = 0x12000, scoped, tag = 'internal scratch']
  %s0 = inlined_call_operand.hbm [shape: bf16[4,32], index: 0, kind: input, shape index: {}]
  %s1 = inlined_call_operand.hbm [shape: bf16[16,32], index: 1, kind: input, shape index: {}]
  %s2 = inlined_call_operand.vmem [shape: f32[2,16], index: 2, kind: input, shape index: {}]
  %s3 = inlined_call_operand.hbm [shape: f32[4,16], index: 3, kind: output, shape index: {}]
  %s4 = sld [smem:[#allocation0]]
  $region30: #{tpu_custom_call.1} parent=0
    _
  %s6 = ssub.s32 1, %s4
  %s7 = scalar_select 0, %s6, %s4
  $region1: #{tpu_custom_call.1} parent=0
    #allocation2 [shape = 'u8[1024]{0}', space=vmem, size = 0x400, scoped, tag = 'input window, operand 0, single buffered']
    #allocation3 [shape = 's32[1]{0}', space=sflag, size = 0x4, scoped, tag = 'scoped memory for tpu_custom_call.1']
    #allocation4 [shape = 's32[1]{0}', space=sflag, size = 0x4, scoped, tag = 'scoped memory for tpu_custom_call.1']
    #allocation5 [shape = 'u8[4096]{0}', space=vmem, size = 0x1000, scoped, tag = 'input window, operand 1, single buffered']
    #allocation6 [shape = 's32[1]{0}', space=sflag, size = 0x4, scoped, tag = 'scoped memory for tpu_custom_call.1']
    #allocation7 [shape = 'u8[2048]{0}', space=vmem, size = 0x800, scoped, tag = 'output window, operand 0, single buffered']
    %8 = vsyncpa [#allocation3], 0
    %9 = vsyncpa [#allocation6], 0
    %10 = vsyncpa [#allocation4], 0
    // Predicated region
    $region2: #{tpu_custom_call.1} parent=1 // pred_check
      _
    $region3: #{tpu_custom_call.1} parent=1 // pred_check_branch
      %12 = sbr.rel (0) target = $region5
    $region4: #{tpu_custom_call.1} parent=1 // pred_region
      %s14 = ssub.s32 32, 32
      %15 = vsyncadd [#allocation3], %s14
      %s17 = sshll.u32 [#allocation2], 4
      %s18 = int_to_ptr.vmem [resolvable:$true] %s17
      %20 = dma.hbm_to_vmem [thread:$0]  %s0, 32, %s18, [#allocation3]
    $region5: #{tpu_custom_call.1} parent=1 // pred_fallthru
      _
    // Predicated region
    $region6: #{tpu_custom_call.1} parent=1 // pred_check
      _
    $region7: #{tpu_custom_call.1} parent=1 // pred_check_branch
      %22 = sbr.rel (0) target = $region9
    $region8: #{tpu_custom_call.1} parent=1 // pred_region
      %s24 = ssub.s32 128, 128
      %25 = vsyncadd [#allocation6], %s24
      %s26 = sshll.u32 [#allocation5], 4
      %s27 = int_to_ptr.vmem [resolvable:$true] %s26
      %32 = dma.hbm_to_vmem [thread:$0]  %s1, 128, %s27, [#allocation6], 64, 64, 4
    $region9: #{tpu_custom_call.1} parent=1 // pred_fallthru
      _
    // Predicated region
    $region10: #{tpu_custom_call.1} parent=1 // pred_check
      _
    $region11: #{tpu_custom_call.1} parent=1 // pred_check_branch
      %34 = sbr.rel (0) target = $region13
    $region12: #{tpu_custom_call.1} parent=1 // pred_region
      _
    $region13: #{tpu_custom_call.1} parent=1 // pred_fallthru
      _
    // Predicated region
    $region14: #{tpu_custom_call.1} parent=1 // pred_check
      _
    $region15: #{tpu_custom_call.1} parent=1 // pred_check_branch
      %36 = sbr.rel (0) target = $region17
    $region16: #{tpu_custom_call.1} parent=1 // pred_region
      %37 = dma.done [#allocation3], 32
    $region17: #{tpu_custom_call.1} parent=1 // pred_fallthru
      _
    // Predicated region
    $region18: #{tpu_custom_call.1} parent=1 // pred_check
      _
    $region19: #{tpu_custom_call.1} parent=1 // pred_check_branch
      %39 = sbr.rel (0) target = $region21
    $region20: #{tpu_custom_call.1} parent=1 // pred_region
      %40 = dma.done [#allocation6], 128
    $region21: #{tpu_custom_call.1} parent=1 // pred_fallthru
      _
    %v42 = vld [vmem:[#allocation2] sm:$0x3]
    %v43 = vld [vmem:[#allocation5] sm:$0xf]
    %v44 = vld [vmem:[#allocation5 + $0x4] sm:$0xf]
    %v47 = vunpack.c.l.b16 %v43
    %v48 = vunpack.c.l.b16 %v44
    %v49 = vpack.c.b16 %v48, %v47
    %vm50 = vcmask 261120
    %v52 = vsel %vm50, %v42, 0
    %v55 = vsel %vm50, %v49, 0
    %57 = vmatprep.subr.bf16.mxu0 0
    %58 = vmatpush1.bf16.xpose.msra.mxu0 %v55
    %59 = vmatprep.subr.bf16.mxu0 0
    %60 = vmatpush1.bf16.xpose.msra.mxu0 0
    %61 = vmatprep.subr.bf16.mxu0 0
    %62 = vmatpush1.bf16.xpose.msra.mxu0 0
    %63 = vmatprep.subr.bf16.mxu0 0
    %64 = vmatpush1.bf16.xpose.msra.mxu0 0
    %65 = vmatprep.subr.bf16.mxu0 0
    %66 = vmatpush1.bf16.xpose.msra.mxu0 0
    %67 = vmatprep.subr.bf16.mxu0 0
    %68 = vmatpush1.bf16.xpose.msra.mxu0 0
    %69 = vmatprep.subr.bf16.mxu0 0
    %70 = vmatpush1.bf16.xpose.msra.mxu0 0
    %71 = vmatprep.subr.bf16.mxu0 0
    %72 = vmatpush1.bf16.xpose.msra.mxu0 0
    %73 = vmatprep.subr.bf16.mxu0 0
    %74 = vmatpush1.bf16.xpose.msra.mxu0 0
    %75 = vmatprep.subr.bf16.mxu0 0
    %76 = vmatpush1.bf16.xpose.msra.mxu0 0
    %77 = vmatprep.subr.bf16.mxu0 0
    %78 = vmatpush1.bf16.xpose.msra.mxu0 0
    %79 = vmatprep.subr.bf16.mxu0 0
    %80 = vmatpush1.bf16.xpose.msra.mxu0 0
    %81 = vmatprep.subr.bf16.mxu0 0
    %82 = vmatpush1.bf16.xpose.msra.mxu0 0
    %83 = vmatprep.subr.bf16.mxu0 0
    %84 = vmatpush1.bf16.xpose.msra.mxu0 0
    %85 = vmatprep.subr.bf16.mxu0 0
    %86 = vmatpush1.bf16.xpose.msra.mxu0 0
    %87 = vmatprep.subr.bf16.mxu0 0
    %88 = vmatpush1.bf16.xpose.msra.mxu0 0
    %89 = vmatprep.mubr.bf16.mxu0 0
    %90 = vmatmul.mubr.bf16.gmra.mrb[0].mxu0 %v52
    %v91 = vpop.f32.mrb[0].mxu0
    %v92 = vadd.f32 0.0, %v91
    %v93 = vpop.f32.mrb[0].mxu0
    %v94 = vpop.f32.mrb[0].mxu0
    %v95 = vpop.f32.mrb[0].mxu0
    %96 = vdwg.mxu0
    %vm97 = vcmask 125952
    %v98 = vsel %vm97, %v92, 0.0
    %v99 = vrot.slane %v98, 4
    %v100 = vadd.f32 %v98, %v99
    %v101 = vrot.slane %v100, 2
    %v102 = vadd.f32 %v100, %v101
    %v103 = vrot.slane %v102, 1
    %v104 = vadd.f32 %v102, %v103
    %v105 = vmul.f32 %v104, 0.25
    %v106 = vmul.f32 %v92, %v92
    %v107 = vsel %vm97, %v106, 0.0
    %v108 = vrot.slane %v107, 4
    %v109 = vadd.f32 %v107, %v108
    %v110 = vrot.slane %v109, 2
    %v111 = vadd.f32 %v109, %v110
    %v112 = vrot.slane %v111, 1
    %v113 = vadd.f32 %v111, %v112
    %v114 = vmul.f32 %v113, 0.25
    %v115 = vmul.f32 %v105, %v105
    %v116 = vsub.f32 %v114, %v115
    %v117 = vmax.f32 %v116, 0.0
    %v118 = vld [vmem:[%s2] sm:$0x1]
    %v119 = vld [vmem:[%s2 + $0x1] sm:$0x1]
    %v120 = vadd.f32 %v117, 1e-05
    %v121 = vrsqrt.pop %v120
    %v122 = vmul.f32 %v118, %v121
    %v123 = vmul.f32 %v105, %v122
    %v124 = vsub.f32 %v119, %v123
    %v125 = vlaneseq
    %v126 = vshrl.u32 %v125, 7
    %v127 = vsub.s32 0, %v126
    %v128 = vrot.slane %v122, %v127
    %v129 = vmul.f32 %v92, %v128
    %v130 = vlaneseq
    %v131 = vshrl.u32 %v130, 7
    %v132 = vsub.s32 0, %v131
    %v133 = vrot.slane %v124, %v132
    %v134 = vadd.f32 %v129, %v133
    %v135 = vmul.f32 %v134, 0.2
    %v136 = vmax.f32 %v134, %v135
    %137 = vst.msk [vmem:[#allocation7] sm:$0xf] %vm97, %v136
    // Predicated region
    $region22: #{tpu_custom_call.1} parent=1 // pred_check
      _
    $region23: #{tpu_custom_call.1} parent=1 // pred_check_branch
      %139 = sbr.rel (0) target = $region25
    $region24: #{tpu_custom_call.1} parent=1 // pred_region
      %s141 = ssub.s32 64, 64
      %142 = vsyncadd [#allocation4], %s141
      %s144 = sshll.u32 [#allocation7], 4
      %s145 = int_to_ptr.vmem [resolvable:$true] %s144
      %147 = dma.vmem_to_hbm [thread:$0]  %s145, 64, %s3, [#allocation4]
    $region25: #{tpu_custom_call.1} parent=1 // pred_fallthru
      _
    // Predicated region
    $region26: #{tpu_custom_call.1} parent=1 // pred_check
      _
    $region27: #{tpu_custom_call.1} parent=1 // pred_check_branch
      %149 = sbr.rel (0) target = $region29
    $region28: #{tpu_custom_call.1} parent=1 // pred_region
      %150 = dma.done [#allocation4], 64
    $region29: #{tpu_custom_call.1} parent=1 // pred_fallthru
      _
    %151 = vsyncpa [#allocation3], 1
    %152 = vsyncpa [#allocation6], 1
    %153 = vsyncpa [#allocation4], 1

</llo_original>
